<compile_context>
chip_gen: v7x
topology: tpu7x:2x2x1
jax: 0.10.0
libtpu: 0.0.40
codegen_flags: <defaults>
</compile_context>

<pallas_src>
import math

import numpy as np
import jax
import jax.numpy as jnp
from jax import lax
from jax.experimental import pallas as pl
from jax.experimental.pallas import tpu as pltpu


# ---------------------------------------------------------------------------
# Pallas kernel.
# Data block: (TB, NR, L); tables: (NR, L).  Per slab (2-D, lane-dense):
#   out = x*cos + x_next*sin_a + x_prev*sin_b
#     sin_a[k] = -sin[k] on even lanes, 0 on odd lanes  -> pairs with x[k+1]
#     sin_b[k] =  sin[k] on odd lanes,  0 on even lanes -> pairs with x[k-1]
# ---------------------------------------------------------------------------
def _rope_kernel(t_ref, cos_ref, sin_a_ref, sin_b_ref, o_ref):
    lanes = t_ref.shape[-1]
    n_slabs = t_ref.shape[0]

    def slab(i, carry):
        x = t_ref[i].astype(jnp.float32)            # (NR, L), f32 in-register
        # x_next[k] = x[(k+1) % L], x_prev[k] = x[(k-1) % L]; wraparound and
        # token-segment crossings are annihilated by zeros in sin_a / sin_b.
        x_next = pltpu.roll(x, lanes - 1, axis=1)   # positive axis (required)
        x_prev = pltpu.roll(x, 1, axis=1)
        y = (x * cos_ref[...]
             + x_next * sin_a_ref[...]
             + x_prev * sin_b_ref[...])
        o_ref[i] = y.astype(o_ref.dtype)
        return carry

    lax.fori_loop(0, n_slabs, slab, 0, unroll=(n_slabs <= 16))


# ---------------------------------------------------------------------------
# Tiling helpers
# ---------------------------------------------------------------------------
def _choose_fold(d):
    """Fold factor so fold*d is a multiple of 128 lanes."""
    return 1 if d % 128 == 0 else 128 // math.gcd(d, 128)


def _num_tensorcores():
    """2 TensorCores/chip on v7x, else 1 (only used to bias the grid length)."""
    try:
        kind = jax.devices()[0].device_kind.lower()
    except Exception:
        return 1
    return 2 if ("v7" in kind or "tpu7" in kind) else 1


def _choose_batch_tile(bh, slab_bytes, *, target_bytes, num_cores):
    """Largest TB dividing bh with TB*slab_bytes <= target_bytes, preferring a
    grid length that is a multiple of num_cores (v7x 2-TC balance) and >= 2
    steps (double-buffered pipeline).  TB is a leading dim of the (TB, NR, L)
    block, so it carries no sublane-alignment constraint (dtype tiling lives
    entirely in (NR, L))."""
    divisors = [d for d in range(1, bh + 1) if bh % d == 0]
    fits = [d for d in divisors if d * slab_bytes <= target_bytes]
    if not fits:
        return 1
    tiers = (
        [d for d in fits if (bh // d) % num_cores == 0 and bh // d >= 2 * num_cores],
        [d for d in fits if (bh // d) % num_cores == 0 and bh // d >= num_cores],
        [d for d in fits if bh // d >= 2],
        fits,
    )
    for tier in tiers:
        if tier:
            return max(tier)
    return 1


# ---------------------------------------------------------------------------
# Table preparation (hoisted out of the per-call forward path)
# ---------------------------------------------------------------------------
def precompute_rope_tables(freqs_cos, freqs_sin):
    """Fold the (N, D) cos/sin buffers lane-dense and bake rotate_half's sign
    and even/odd selection into two signed sin tables.  Tables stay f32 (the
    kernel computes in f32 and casts only at the store)."""
    N, D = freqs_cos.shape
    assert D % 2 == 0, "rotary feature dim must be even (D = 2*dim)"
    fold = _choose_fold(D)
    n_pad = (-N) % fold                                   # zero-row padding

    cos = freqs_cos.astype(jnp.float32)
    sin = freqs_sin.astype(jnp.float32)
    even = (jnp.arange(D) % 2) == 0
    sin_a = jnp.where(even, -sin, 0.0)                    # multiplies x[k+1]
    sin_b = jnp.where(even, 0.0, sin)                     # multiplies x[k-1]

    if n_pad:
        pad = ((0, n_pad), (0, 0))
        cos = jnp.pad(cos, pad)
        sin_a = jnp.pad(sin_a, pad)
        sin_b = jnp.pad(sin_b, pad)

    NR = (N + n_pad) // fold
    L = fold * D
    return dict(
        cos=cos.reshape(NR, L),
        sin_a=sin_a.reshape(NR, L),
        sin_b=sin_b.reshape(NR, L),
        fold=fold, n_pad=n_pad, n_tokens=N, dim=D,
    )


# ---------------------------------------------------------------------------
# Forward pass of VisionRotaryEmbeddingFast
# ---------------------------------------------------------------------------
def apply_vision_rope(t, freqs_cos=None, freqs_sin=None, *, tables=None,
                      target_block_bytes=4 << 20):
    """t: (B, H, N, D); freqs_cos / freqs_sin: (N, D).  D must be even."""
    B, H, N, D = t.shape
    if tables is None:
        tables = precompute_rope_tables(freqs_cos, freqs_sin)
    assert tables["n_tokens"] == N and tables["dim"] == D
    fold, n_pad = tables["fold"], tables["n_pad"]
    cos, sin_a, sin_b = tables["cos"], tables["sin_a"], tables["sin_b"]
    NR, L = cos.shape

    dtype = t.dtype
    itemsize = jnp.dtype(dtype).itemsize
    BH = B * H

    if n_pad:
        t = jnp.pad(t, ((0, 0), (0, 0), (0, n_pad), (0, 0)))
    t3 = t.reshape(BH, NR, L)                          # lane-dense, 3-D

    slab_bytes = NR * L * itemsize
    num_cores = _num_tensorcores()
    TB = _choose_batch_tile(BH, slab_bytes,
                            target_bytes=target_block_bytes,
                            num_cores=num_cores)
    grid = (BH // TB,)

    block_bytes = TB * slab_bytes
    table_bytes = NR * L * 4
    # 2x(in) + 2x(out) double-buffered blocks + 2x each of 3 small f32 tables.
    vmem_need = 4 * block_bytes + 6 * table_bytes + (2 << 20)
    vmem_limit = int(min(max(vmem_need, 24 << 20), 48 << 20))

    cost = pl.CostEstimate(
        flops=int(5 * BH * NR * L),
        transcendentals=0,
        bytes_accessed=int(2 * BH * NR * L * itemsize + 3 * table_bytes),
    )

    data_spec = pl.BlockSpec((TB, NR, L), lambda b: (b, 0, 0))
    table_spec = pl.BlockSpec((NR, L), lambda b: (0, 0))   # block-resident

    # NOTE: input_output_aliases={0: 0} would halve peak HBM footprint but is
    # skipped so callers may keep using `t` after the call.
    out3 = pl.pallas_call(
        _rope_kernel,
        out_shape=jax.ShapeDtypeStruct((BH, NR, L), dtype),
        grid_spec=pltpu.PrefetchScalarGridSpec(
            num_scalar_prefetch=0,
            grid=grid,
            in_specs=[data_spec, table_spec, table_spec, table_spec],
            out_specs=data_spec,
        ),
        compiler_params=pltpu.CompilerParams(
            dimension_semantics=("parallel",),
            vmem_limit_bytes=vmem_limit,
        ),
        cost_estimate=cost,
    )(t3, cos, sin_a, sin_b)

    out = out3.reshape(B, H, NR * fold, D)
    if n_pad:
        out = out[:, :, :N, :]
    return out


# ---------------------------------------------------------------------------
# Module equivalent: __init__ builds the freq buffers + folded tables once.
# ---------------------------------------------------------------------------
def build_rope_freqs(dim, pt_seq_len=16, ft_seq_len=None, theta=10000.0,
                     freqs_for="lang", max_freq=10, num_freqs=1):
    if freqs_for == "lang":
        freqs = 1.0 / (theta ** (jnp.arange(0, dim, 2)[: dim // 2]
                                 .astype(jnp.float32) / dim))
    elif freqs_for == "pixel":
        freqs = jnp.linspace(1.0, max_freq / 2, dim // 2) * np.pi
    elif freqs_for == "constant":
        freqs = jnp.ones((num_freqs,), jnp.float32)
    else:
        raise ValueError(f"unknown modality {freqs_for}")

    if ft_seq_len is None:
        ft_seq_len = pt_seq_len

    t = jnp.arange(ft_seq_len, dtype=jnp.float32) / ft_seq_len * pt_seq_len
    freqs = jnp.einsum("i,j->ij", t, freqs)            # (ft, dim//2)
    freqs = jnp.repeat(freqs, 2, axis=-1)              # '... n -> ... (n r)'
    a = jnp.broadcast_to(freqs[:, None, :],
                         (ft_seq_len, ft_seq_len, freqs.shape[-1]))
    b = jnp.broadcast_to(freqs[None, :, :],
                         (ft_seq_len, ft_seq_len, freqs.shape[-1]))
    f = jnp.concatenate([a, b], axis=-1).reshape(-1, 2 * (dim // 2) * 2)
    return jnp.cos(f), jnp.sin(f)                      # each (ft*ft, 2*dim)


class VisionRotaryEmbeddingFast:
    """JAX/Pallas port: tables are folded/sign-baked once at init;
    forward is a single pallas_call."""

    def __init__(self, dim, pt_seq_len=16, ft_seq_len=None, theta=10000.0,
                 freqs_for="lang", max_freq=10, num_freqs=1):
        self.freqs_cos, self.freqs_sin = build_rope_freqs(
            dim, pt_seq_len, ft_seq_len, theta, freqs_for, max_freq, num_freqs)
        self._tables = precompute_rope_tables(self.freqs_cos, self.freqs_sin)

    def __call__(self, t):
        return apply_vision_rope(t, tables=self._tables)


# ---------------------------------------------------------------------------
# Pure-JAX reference (mirrors the PyTorch forward) for correctness check
# ---------------------------------------------------------------------------
def _rotate_half_ref(x):
    x1 = x[..., 0::2]
    x2 = x[..., 1::2]
    return jnp.stack([-x2, x1], axis=-1).reshape(x.shape)


def _rope_ref(t, cos, sin):
    return t * cos + _rotate_half_ref(t) * sin


if __name__ == "__main__":
    # dim=16 (per-axis rotary half-dim) -> D=32, ft_seq_len=8 -> N=64 tokens;
    # input t: (B=2, H=4, N=64, D=32).
    dim, pt_seq_len, ft_seq_len = 16, 16, 8
    B, H = 2, 4
    N, D = ft_seq_len * ft_seq_len, 2 * dim

    rope = VisionRotaryEmbeddingFast(dim, pt_seq_len, ft_seq_len)
    assert rope.freqs_cos.shape == (N, D)

    key = jax.random.PRNGKey(0)
    t = jax.random.normal(key, (B, H, N, D), dtype=jnp.float32)

    # f32 path (strict parity with the PyTorch-style reference).
    out = jax.block_until_ready(rope(t))
    ref = _rope_ref(t, rope.freqs_cos, rope.freqs_sin)
    np.testing.assert_allclose(np.asarray(out), np.asarray(ref),
                               rtol=1e-5, atol=1e-5)

    # bf16 I/O path (f32 in-register compute, cast at the store).
    t_bf = t.astype(jnp.bfloat16)
    out_bf = jax.block_until_ready(rope(t_bf))
    ref_bf = _rope_ref(t_bf.astype(jnp.float32),
                       rope.freqs_cos, rope.freqs_sin).astype(jnp.bfloat16)
    np.testing.assert_allclose(np.asarray(out_bf, dtype=np.float32),
                               np.asarray(ref_bf, dtype=np.float32),
                               rtol=2e-2, atol=2e-2)

    # Odd token count (N=49): exercises the zero-pad fallback for N % fold != 0.
    ft_odd = 7
    rope_odd = VisionRotaryEmbeddingFast(dim, pt_seq_len, ft_odd)
    N_odd = ft_odd * ft_odd
    t_odd = jax.random.normal(jax.random.PRNGKey(0), (B, H, N_odd, D),
                              dtype=jnp.float32)
    out_odd = jax.block_until_ready(rope_odd(t_odd))
    ref_odd = _rope_ref(t_odd, rope_odd.freqs_cos, rope_odd.freqs_sin)
    np.testing.assert_allclose(np.asarray(out_odd), np.asarray(ref_odd),
                               rtol=1e-5, atol=1e-5)

    print("KERNEL_OK")
</pallas_src>

<mosaic_0001>
module attributes {stable_mosaic.version = 11 : i64} {
  func.func @_rope_kernel(%arg0: i32, %arg1: memref<4x16x128xf32, #tpu.memory_space<vmem>>, %arg2: memref<16x128xf32, #tpu.memory_space<vmem>>, %arg3: memref<16x128xf32, #tpu.memory_space<vmem>>, %arg4: memref<16x128xf32, #tpu.memory_space<vmem>>, %arg5: memref<4x16x128xf32, #tpu.memory_space<vmem>>) attributes {dimension_semantics = [#tpu.dimension_semantics<parallel>], iteration_bounds = array<i64: 2>, scalar_prefetch = 0 : i64, scratch_operands = 0 : i64, tpu.core_type = #tpu.core_type<tc>, window_params = [{transform_indices = @transform_0, window_bounds = array<i64: 4, 16, 128>}, {pipeline_mode = #tpu.pipeline_mode<synchronous>, transform_indices = @transform_1, window_bounds = array<i64: 16, 128>}, {pipeline_mode = #tpu.pipeline_mode<synchronous>, transform_indices = @transform_2, window_bounds = array<i64: 16, 128>}, {pipeline_mode = #tpu.pipeline_mode<synchronous>, transform_indices = @transform_3, window_bounds = array<i64: 16, 128>}, {transform_indices = @transform_4, window_bounds = array<i64: 4, 16, 128>}]} {
    %c0_i32 = arith.constant 0 : i32
    %0 = arith.index_cast %c0_i32 : i32 to index
    %c0 = arith.constant 0 : index
    %c0_0 = arith.constant 0 : index
    %1 = vector.load %arg1[%0, %c0, %c0_0] : memref<4x16x128xf32, #tpu.memory_space<vmem>>, vector<1x16x128xf32>
    %2 = vector.shape_cast %1 : vector<1x16x128xf32> to vector<16x128xf32>
    %c127_i32 = arith.constant 127 : i32
    %3 = tpu.dynamic_rotate %2 by %c127_i32 dim 1 : vector<16x128xf32>, i32 -> vector<16x128xf32>
    %c1_i32 = arith.constant 1 : i32
    %4 = tpu.dynamic_rotate %2 by %c1_i32 dim 1 : vector<16x128xf32>, i32 -> vector<16x128xf32>
    %c0_1 = arith.constant 0 : index
    %c0_2 = arith.constant 0 : index
    %5 = vector.load %arg2[%c0_1, %c0_2] : memref<16x128xf32, #tpu.memory_space<vmem>>, vector<16x128xf32>
    %6 = arith.mulf %2, %5 : vector<16x128xf32>
    %c0_3 = arith.constant 0 : index
    %c0_4 = arith.constant 0 : index
    %7 = vector.load %arg3[%c0_3, %c0_4] : memref<16x128xf32, #tpu.memory_space<vmem>>, vector<16x128xf32>
    %8 = arith.mulf %3, %7 : vector<16x128xf32>
    %9 = arith.addf %6, %8 : vector<16x128xf32>
    %c0_5 = arith.constant 0 : index
    %c0_6 = arith.constant 0 : index
    %10 = vector.load %arg4[%c0_5, %c0_6] : memref<16x128xf32, #tpu.memory_space<vmem>>, vector<16x128xf32>
    %11 = arith.mulf %4, %10 : vector<16x128xf32>
    %12 = arith.addf %9, %11 : vector<16x128xf32>
    %13 = arith.index_cast %c0_i32 : i32 to index
    %c0_7 = arith.constant 0 : index
    %c0_8 = arith.constant 0 : index
    %14 = vector.load %arg5[%13, %c0_7, %c0_8] : memref<4x16x128xf32, #tpu.memory_space<vmem>>, vector<1x16x128xf32>
    %15 = vector.shape_cast %14 : vector<1x16x128xf32> to vector<16x128xf32>
    %16 = vector.shape_cast %12 : vector<16x128xf32> to vector<1x16x128xf32>
    tpu.vector_store %arg5[%13, %c0_7, %c0_8], %16 {strides = array<i32>} : memref<4x16x128xf32, #tpu.memory_space<vmem>>, vector<1x16x128xf32>,
    %c1_i32_9 = arith.constant 1 : i32
    %17 = arith.index_cast %c1_i32_9 : i32 to index
    %c0_10 = arith.constant 0 : index
    %c0_11 = arith.constant 0 : index
    %18 = vector.load %arg1[%17, %c0_10, %c0_11] : memref<4x16x128xf32, #tpu.memory_space<vmem>>, vector<1x16x128xf32>
    %19 = vector.shape_cast %18 : vector<1x16x128xf32> to vector<16x128xf32>
    %c127_i32_12 = arith.constant 127 : i32
    %20 = tpu.dynamic_rotate %19 by %c127_i32_12 dim 1 : vector<16x128xf32>, i32 -> vector<16x128xf32>
    %c1_i32_13 = arith.constant 1 : i32
    %21 = tpu.dynamic_rotate %19 by %c1_i32_13 dim 1 : vector<16x128xf32>, i32 -> vector<16x128xf32>
    %c0_14 = arith.constant 0 : index
    %c0_15 = arith.constant 0 : index
    %22 = vector.load %arg2[%c0_14, %c0_15] : memref<16x128xf32, #tpu.memory_space<vmem>>, vector<16x128xf32>
    %23 = arith.mulf %19, %22 : vector<16x128xf32>
    %c0_16 = arith.constant 0 : index
    %c0_17 = arith.constant 0 : index
    %24 = vector.load %arg3[%c0_16, %c0_17] : memref<16x128xf32, #tpu.memory_space<vmem>>, vector<16x128xf32>
    %25 = arith.mulf %20, %24 : vector<16x128xf32>
    %26 = arith.addf %23, %25 : vector<16x128xf32>
    %c0_18 = arith.constant 0 : index
    %c0_19 = arith.constant 0 : index
    %27 = vector.load %arg4[%c0_18, %c0_19] : memref<16x128xf32, #tpu.memory_space<vmem>>, vector<16x128xf32>
    %28 = arith.mulf %21, %27 : vector<16x128xf32>
    %29 = arith.addf %26, %28 : vector<16x128xf32>
    %30 = arith.index_cast %c1_i32_9 : i32 to index
    %c0_20 = arith.constant 0 : index
    %c0_21 = arith.constant 0 : index
    %31 = vector.load %arg5[%30, %c0_20, %c0_21] : memref<4x16x128xf32, #tpu.memory_space<vmem>>, vector<1x16x128xf32>
    %32 = vector.shape_cast %31 : vector<1x16x128xf32> to vector<16x128xf32>
    %33 = vector.shape_cast %29 : vector<16x128xf32> to vector<1x16x128xf32>
    tpu.vector_store %arg5[%30, %c0_20, %c0_21], %33 {strides = array<i32>} : memref<4x16x128xf32, #tpu.memory_space<vmem>>, vector<1x16x128xf32>,
    %c2_i32 = arith.constant 2 : i32
    %34 = arith.index_cast %c2_i32 : i32 to index
    %c0_22 = arith.constant 0 : index
    %c0_23 = arith.constant 0 : index
    %35 = vector.load %arg1[%34, %c0_22, %c0_23] : memref<4x16x128xf32, #tpu.memory_space<vmem>>, vector<1x16x128xf32>
    %36 = vector.shape_cast %35 : vector<1x16x128xf32> to vector<16x128xf32>
    %c127_i32_24 = arith.constant 127 : i32
    %37 = tpu.dynamic_rotate %36 by %c127_i32_24 dim 1 : vector<16x128xf32>, i32 -> vector<16x128xf32>
    %c1_i32_25 = arith.constant 1 : i32
    %38 = tpu.dynamic_rotate %36 by %c1_i32_25 dim 1 : vector<16x128xf32>, i32 -> vector<16x128xf32>
    %c0_26 = arith.constant 0 : index
    %c0_27 = arith.constant 0 : index
    %39 = vector.load %arg2[%c0_26, %c0_27] : memref<16x128xf32, #tpu.memory_space<vmem>>, vector<16x128xf32>
    %40 = arith.mulf %36, %39 : vector<16x128xf32>
    %c0_28 = arith.constant 0 : index
    %c0_29 = arith.constant 0 : index
    %41 = vector.load %arg3[%c0_28, %c0_29] : memref<16x128xf32, #tpu.memory_space<vmem>>, vector<16x128xf32>
    %42 = arith.mulf %37, %41 : vector<16x128xf32>
    %43 = arith.addf %40, %42 : vector<16x128xf32>
    %c0_30 = arith.constant 0 : index
    %c0_31 = arith.constant 0 : index
    %44 = vector.load %arg4[%c0_30, %c0_31] : memref<16x128xf32, #tpu.memory_space<vmem>>, vector<16x128xf32>
    %45 = arith.mulf %38, %44 : vector<16x128xf32>
    %46 = arith.addf %43, %45 : vector<16x128xf32>
    %47 = arith.index_cast %c2_i32 : i32 to index
    %c0_32 = arith.constant 0 : index
    %c0_33 = arith.constant 0 : index
    %48 = vector.load %arg5[%47, %c0_32, %c0_33] : memref<4x16x128xf32, #tpu.memory_space<vmem>>, vector<1x16x128xf32>
    %49 = vector.shape_cast %48 : vector<1x16x128xf32> to vector<16x128xf32>
    %50 = vector.shape_cast %46 : vector<16x128xf32> to vector<1x16x128xf32>
    tpu.vector_store %arg5[%47, %c0_32, %c0_33], %50 {strides = array<i32>} : memref<4x16x128xf32, #tpu.memory_space<vmem>>, vector<1x16x128xf32>,
    %c3_i32 = arith.constant 3 : i32
    %51 = arith.index_cast %c3_i32 : i32 to index
    %c0_34 = arith.constant 0 : index
    %c0_35 = arith.constant 0 : index
    %52 = vector.load %arg1[%51, %c0_34, %c0_35] : memref<4x16x128xf32, #tpu.memory_space<vmem>>, vector<1x16x128xf32>
    %53 = vector.shape_cast %52 : vector<1x16x128xf32> to vector<16x128xf32>
    %c127_i32_36 = arith.constant 127 : i32
    %54 = tpu.dynamic_rotate %53 by %c127_i32_36 dim 1 : vector<16x128xf32>, i32 -> vector<16x128xf32>
    %c1_i32_37 = arith.constant 1 : i32
    %55 = tpu.dynamic_rotate %53 by %c1_i32_37 dim 1 : vector<16x128xf32>, i32 -> vector<16x128xf32>
    %c0_38 = arith.constant 0 : index
    %c0_39 = arith.constant 0 : index
    %56 = vector.load %arg2[%c0_38, %c0_39] : memref<16x128xf32, #tpu.memory_space<vmem>>, vector<16x128xf32>
    %57 = arith.mulf %53, %56 : vector<16x128xf32>
    %c0_40 = arith.constant 0 : index
    %c0_41 = arith.constant 0 : index
    %58 = vector.load %arg3[%c0_40, %c0_41] : memref<16x128xf32, #tpu.memory_space<vmem>>, vector<16x128xf32>
    %59 = arith.mulf %54, %58 : vector<16x128xf32>
    %60 = arith.addf %57, %59 : vector<16x128xf32>
    %c0_42 = arith.constant 0 : index
    %c0_43 = arith.constant 0 : index
    %61 = vector.load %arg4[%c0_42, %c0_43] : memref<16x128xf32, #tpu.memory_space<vmem>>, vector<16x128xf32>
    %62 = arith.mulf %55, %61 : vector<16x128xf32>
    %63 = arith.addf %60, %62 : vector<16x128xf32>
    %64 = arith.index_cast %c3_i32 : i32 to index
    %c0_44 = arith.constant 0 : index
    %c0_45 = arith.constant 0 : index
    %65 = vector.load %arg5[%64, %c0_44, %c0_45] : memref<4x16x128xf32, #tpu.memory_space<vmem>>, vector<1x16x128xf32>
    %66 = vector.shape_cast %65 : vector<1x16x128xf32> to vector<16x128xf32>
    %67 = vector.shape_cast %63 : vector<16x128xf32> to vector<1x16x128xf32>
    tpu.vector_store %arg5[%64, %c0_44, %c0_45], %67 {strides = array<i32>} : memref<4x16x128xf32, #tpu.memory_space<vmem>>, vector<1x16x128xf32>,
    %c4_i32 = arith.constant 4 : i32
    return
  }
  func.func @transform_0(%arg0: i32) -> (i32, i32, i32) {
    %c0_i32 = arith.constant 0 : i32
    %c0_i32_0 = arith.constant 0 : i32
    %c0_i32_1 = arith.constant 0 : i32
    return %arg0, %c0_i32, %c0_i32_0 : i32, i32, i32
  }
  func.func @transform_1(%arg0: i32) -> (i32, i32) {
    %c0_i32 = arith.constant 0 : i32
    %c0_i32_0 = arith.constant 0 : i32
    %c0_i32_1 = arith.constant 0 : i32
    return %c0_i32, %c0_i32_0 : i32, i32
  }
  func.func @transform_2(%arg0: i32) -> (i32, i32) {
    %c0_i32 = arith.constant 0 : i32
    %c0_i32_0 = arith.constant 0 : i32
    %c0_i32_1 = arith.constant 0 : i32
    return %c0_i32, %c0_i32_0 : i32, i32
  }
  func.func @transform_3(%arg0: i32) -> (i32, i32) {
    %c0_i32 = arith.constant 0 : i32
    %c0_i32_0 = arith.constant 0 : i32
    %c0_i32_1 = arith.constant 0 : i32
    return %c0_i32, %c0_i32_0 : i32, i32
  }
  func.func @transform_4(%arg0: i32) -> (i32, i32, i32) {
    %c0_i32 = arith.constant 0 : i32
    %c0_i32_0 = arith.constant 0 : i32
    %c0_i32_1 = arith.constant 0 : i32
    return %arg0, %c0_i32, %c0_i32_0 : i32, i32, i32
  }
}

</mosaic_0001>

<llo_original>
// kernel: tpu_custom_call.1
$region0: #{tpu_custom_call.1}
  #allocation0 [shape = 'u32[]', space=smem, size = 0x4, offset = 0x4, fixed_abs, tag = 'smem constant byte address 0x4 - core index']
  #allocation1 [shape = 'u32[144,128]{1,0:T(1,128)}', space=vmem, size = 0x12000, scoped, tag = 'internal scratch']
  %s0 = inlined_call_operand.hbm [shape: f32[8,16,128], index: 0, kind: input, shape index: {}]
  %s1 = inlined_call_operand.hbm [shape: f32[16,128], index: 1, kind: input, shape index: {}]
  %s2 = inlined_call_operand.hbm [shape: f32[16,128], index: 2, kind: input, shape index: {}]
  %s3 = inlined_call_operand.hbm [shape: f32[16,128], index: 3, kind: input, shape index: {}]
  %s4 = inlined_call_operand.hbm [shape: f32[8,16,128], index: 4, kind: output, shape index: {}]
  %s5 = sld [smem:[#allocation0]]
  $region65: #{tpu_custom_call.1} parent=0
    _
  %s7 = ssub.s32 1, %s5
  %s8 = scalar_select 0, %s7, %s5
  $region1: #{tpu_custom_call.1} parent=0
    #allocation2 [shape = 'u8[65536]{0}', space=vmem, size = 0x10000, scoped, tag = 'input window, operand 0']
    #allocation3 [shape = 's32[2]{0}', space=sflag, size = 0x8, scoped, tag = 'scoped memory for tpu_custom_call.1']
    #allocation4 [shape = 's32[2]{0}', space=sflag, size = 0x8, scoped, tag = 'scoped memory for tpu_custom_call.1']
    #allocation5 [shape = 'u8[8192]{0}', space=vmem, size = 0x2000, scoped, tag = 'input window, operand 1, single buffered']
    #allocation6 [shape = 's32[1]{0}', space=sflag, size = 0x4, scoped, tag = 'scoped memory for tpu_custom_call.1']
    #allocation7 [shape = 'u8[8192]{0}', space=vmem, size = 0x2000, scoped, tag = 'input window, operand 2, single buffered']
    #allocation8 [shape = 'u8[8192]{0}', space=vmem, size = 0x2000, scoped, tag = 'input window, operand 3, single buffered']
    #allocation9 [shape = 's32[1]{0}', space=sflag, size = 0x4, scoped, tag = 'scoped memory for tpu_custom_call.1']
    #allocation10 [shape = 'u8[65536]{0}', space=vmem, size = 0x10000, scoped, tag = 'output window, operand 0']
    %9 = vsyncpa [#allocation3], 0
    %s10 = scalar_lea.sflag [#allocation3], 1
    %11 = vsyncpa %s10, 0
    %12 = vsyncpa [#allocation6], 0
    %13 = vsyncpa [#allocation9], 0
    %14 = vsyncpa [#allocation4], 0
    %s15 = scalar_lea.sflag [#allocation4], 1
    %16 = vsyncpa %s15, 0
    loop: start=0, step=1, limit=4
    $region2: #{tpu_custom_call.1} parent=1 // loop_pre_header
      _
    $region3: #{tpu_custom_call.1} parent=1 // loop_header
      %s18 = sphi 0, %s22
      %p19 = scmp.ge.s32.totalorder %s18, 4
      %s28 = sphi 0, %s30
      %s31 = sphi 0, %s28
      %s32 = sphi 0, %s31
      %s48 = sphi 0, %s32
      %s52 = sphi 0, %s52
      %s54 = sphi 0, %s52
      %s55 = sphi 0, %s54
      %s69 = sphi 0, %s55
      %s73 = sphi 0, %s73
      %s75 = sphi 0, %s73
      %s76 = sphi 0, %s75
      %s90 = sphi 0, %s76
      %s94 = sphi 0, %s94
      %s96 = sphi 0, %s94
      %s97 = sphi 0, %s96
      %s111 = sphi 0, %s97
      %s117 = sphi 0, %s119
      %s120 = sphi 0, %s117
      %s121 = sphi 0, %s120
      %s137 = sphi 0, %s121
    $region4: #{tpu_custom_call.1} parent=1 // loop_header_branch
      %21 = sbr.rel (%p19) target = $region8
    $region5: #{tpu_custom_call.1} parent=1 // loop_body
      %s23 = ssub.s32 %s18, 1
      %s24 = ssub.s32 %s18, 2
      %s25 = sadd.s32 %s18, 1
      %s26 = ssub.s32 %s18, %s25
      %p27 = scmp.eq.s32.totalorder %s26, 0
      %s29 = sadd.s32 %s28, 1
      %s30 = scalar_select %p27, %s28, %s29
      %p33 = pneg %p27
      %p34 = scmp.eq.s32.totalorder %s18, 1
      %p35 = por %p33, %p34
      %p36 = scmp.ne.s32.totalorder %s28, %s31
      %p37 = scmp.eq.s32.totalorder %s18, 0
      %p38 = por %p36, %p37
      %p39 = scmp.ne.s32.totalorder %s28, %s31
      %p40 = scmp.eq.s32.totalorder %s23, 1
      %p41 = por %p39, %p40
      %p42 = scmp.ne.s32.totalorder %s31, %s32
      %p43 = scmp.eq.s32.totalorder %s23, 0
      %p44 = por %p42, %p43
      %p45 = scmp.ne.s32.totalorder %s31, %s32
      %p46 = scmp.eq.s32.totalorder %s24, 1
      %p47 = por %p45, %p46
      %p49 = scmp.ne.s32.totalorder %s32, %s48
      %p50 = scmp.eq.s32.totalorder %s24, 0
      %p51 = por %p49, %p50
      %s53 = sadd.s32 %s52, 1
      %p56 = scmp.eq.s32.totalorder %s18, 1
      %p57 = scmp.ne.s32.totalorder %s52, %s54
      %p58 = scmp.eq.s32.totalorder %s18, 0
      %p59 = por %p57, %p58
      %p60 = scmp.ne.s32.totalorder %s52, %s54
      %p61 = scmp.eq.s32.totalorder %s23, 1
      %p62 = por %p60, %p61
      %p63 = scmp.ne.s32.totalorder %s54, %s55
      %p64 = scmp.eq.s32.totalorder %s23, 0
      %p65 = por %p63, %p64
      %p66 = scmp.ne.s32.totalorder %s54, %s55
      %p67 = scmp.eq.s32.totalorder %s24, 1
      %p68 = por %p66, %p67
      %p70 = scmp.ne.s32.totalorder %s55, %s69
      %p71 = scmp.eq.s32.totalorder %s24, 0
      %p72 = por %p70, %p71
      %s74 = sadd.s32 %s73, 1
      %p77 = scmp.eq.s32.totalorder %s18, 1
      %p78 = scmp.ne.s32.totalorder %s73, %s75
      %p79 = scmp.eq.s32.totalorder %s18, 0
      %p80 = por %p78, %p79
      %p81 = scmp.ne.s32.totalorder %s73, %s75
      %p82 = scmp.eq.s32.totalorder %s23, 1
      %p83 = por %p81, %p82
      %p84 = scmp.ne.s32.totalorder %s75, %s76
      %p85 = scmp.eq.s32.totalorder %s23, 0
      %p86 = por %p84, %p85
      %p87 = scmp.ne.s32.totalorder %s75, %s76
      %p88 = scmp.eq.s32.totalorder %s24, 1
      %p89 = por %p87, %p88
      %p91 = scmp.ne.s32.totalorder %s76, %s90
      %p92 = scmp.eq.s32.totalorder %s24, 0
      %p93 = por %p91, %p92
      %s95 = sadd.s32 %s94, 1
      %p98 = scmp.eq.s32.totalorder %s18, 1
      %p99 = scmp.ne.s32.totalorder %s94, %s96
      %p100 = scmp.eq.s32.totalorder %s18, 0
      %p101 = por %p99, %p100
      %p102 = scmp.ne.s32.totalorder %s94, %s96
      %p103 = scmp.eq.s32.totalorder %s23, 1
      %p104 = por %p102, %p103
      %p105 = scmp.ne.s32.totalorder %s96, %s97
      %p106 = scmp.eq.s32.totalorder %s23, 0
      %p107 = por %p105, %p106
      %p108 = scmp.ne.s32.totalorder %s96, %s97
      %p109 = scmp.eq.s32.totalorder %s24, 1
      %p110 = por %p108, %p109
      %p112 = scmp.ne.s32.totalorder %s97, %s111
      %p113 = scmp.eq.s32.totalorder %s24, 0
      %p114 = por %p112, %p113
      %s115 = ssub.s32 %s18, %s25
      %p116 = scmp.eq.s32.totalorder %s115, 0
      %s118 = sadd.s32 %s117, 1
      %s119 = scalar_select %p116, %s117, %s118
      %p122 = pneg %p116
      %p123 = scmp.eq.s32.totalorder %s18, 1
      %p124 = por %p122, %p123
      %p125 = scmp.ne.s32.totalorder %s117, %s120
      %p126 = scmp.eq.s32.totalorder %s18, 0
      %p127 = por %p125, %p126
      %p128 = scmp.ne.s32.totalorder %s117, %s120
      %p129 = scmp.eq.s32.totalorder %s23, 1
      %p130 = por %p128, %p129
      %p131 = scmp.ne.s32.totalorder %s120, %s121
      %p132 = scmp.eq.s32.totalorder %s23, 0
      %p133 = por %p131, %p132
      %p134 = scmp.ne.s32.totalorder %s120, %s121
      %p135 = scmp.eq.s32.totalorder %s24, 1
      %p136 = por %p134, %p135
      %p138 = scmp.ne.s32.totalorder %s121, %s137
      %p139 = scmp.eq.s32.totalorder %s24, 0
      %p140 = por %p138, %p139
      %p141 = scmp.le.s32.totalorder 1, %s18
      %p142 = scmp.lt.s32.totalorder %s18, 3
      %p143 = pnand %p141, %p142
      %p144 = pneg %p143
      // Predicated region
      $region9: #{tpu_custom_call.1} parent=5 // pred_check
        _
      $region10: #{tpu_custom_call.1} parent=5 // pred_check_branch
        %146 = sbr.rel (%p143) target = $region12
      $region11: #{tpu_custom_call.1} parent=5 // pred_region
        %s147 = ssub.s32 %s18, 1
        // Predicated region
        $region13: #{tpu_custom_call.1} parent=11 // pred_check
          %p148 = pneg %p65
        $region14: #{tpu_custom_call.1} parent=11 // pred_check_branch
          %150 = sbr.rel (%p148) target = $region16
        $region15: #{tpu_custom_call.1} parent=11 // pred_region
          %s152 = ssub.s32 256, 256
          %153 = vsyncadd [#allocation6], %s152
          %s154 = sshll.u32 [#allocation5], 4
          %s155 = int_to_ptr.vmem [resolvable:$true] %s154
          %160 = dma.hbm_to_vmem [thread:$0]  %s1, 256, %s155, [#allocation6], 128, 128, 8
        $region16: #{tpu_custom_call.1} parent=11 // pred_fallthru
          _
        // Predicated region
        $region17: #{tpu_custom_call.1} parent=11 // pred_check
          %p161 = pneg %p86
        $region18: #{tpu_custom_call.1} parent=11 // pred_check_branch
          %163 = sbr.rel (%p161) target = $region20
        $region19: #{tpu_custom_call.1} parent=11 // pred_region
          %s165 = ssub.s32 256, 256
          %166 = vsyncadd [#allocation6], %s165
          %s167 = sshll.u32 [#allocation7], 4
          %s168 = int_to_ptr.vmem [resolvable:$true] %s167
          %173 = dma.hbm_to_vmem [thread:$0]  %s2, 256, %s168, [#allocation6], 128, 128, 8
        $region20: #{tpu_custom_call.1} parent=11 // pred_fallthru
          _
        // Predicated region
        $region21: #{tpu_custom_call.1} parent=11 // pred_check
          %p174 = pneg %p107
        $region22: #{tpu_custom_call.1} parent=11 // pred_check_branch
          %176 = sbr.rel (%p174) target = $region24
        $region23: #{tpu_custom_call.1} parent=11 // pred_region
          %s178 = ssub.s32 256, 256
          %179 = vsyncadd [#allocation9], %s178
          %s180 = sshll.u32 [#allocation8], 4
          %s181 = int_to_ptr.vmem [resolvable:$true] %s180
          %186 = dma.hbm_to_vmem [thread:$0]  %s3, 256, %s181, [#allocation9], 128, 128, 8
        $region24: #{tpu_custom_call.1} parent=11 // pred_fallthru
          _
      $region12: #{tpu_custom_call.1} parent=5 // pred_fallthru
        _
      %p187 = scmp.lt.s32.totalorder %s18, 2
      // Predicated region
      $region25: #{tpu_custom_call.1} parent=5 // pred_check
        %p188 = pneg %p187
      $region26: #{tpu_custom_call.1} parent=5 // pred_check_branch
        %190 = sbr.rel (%p188) target = $region28
      $region27: #{tpu_custom_call.1} parent=5 // pred_region
        // Predicated region
        $region29: #{tpu_custom_call.1} parent=27 // pred_check
          %p191 = pneg %p38
        $region30: #{tpu_custom_call.1} parent=27 // pred_check_branch
          %193 = sbr.rel (%p191) target = $region32
        $region31: #{tpu_custom_call.1} parent=27 // pred_region
          %s194 = sand.u32 %s28, 1
          %s195 = scalar_lea.sflag [#allocation3], %s194
          %s196 = sand.u32 %s28, 1
          %s197 = smul.addr %s196, 64
          %s198 = scalar_lea.vmem [#allocation2], %s197
          %s199 = smul.u32 4, %s18
          %s201 = ssub.s32 1024, 1024
          %202 = vsyncadd %s195, %s201
          %s203 = smul.addr %s199, 2
          %s204 = smul.addr %s203, 128
          %s205 = scalar_lea.hbm %s0, %s204
          %s206 = sshll.u32 %s198, 4
          %s207 = int_to_ptr.vmem [resolvable:$true] %s206
          %212 = dma.hbm_to_vmem [thread:$0]  %s205, 1024, %s207, %s195, 128, 128, 8
        $region32: #{tpu_custom_call.1} parent=27 // pred_fallthru
          _
      $region28: #{tpu_custom_call.1} parent=5 // pred_fallthru
        _
      %p213 = scmp.le.s32.totalorder 1, %s18
      %p214 = scmp.lt.s32.totalorder %s18, 3
      %p215 = pnand %p213, %p214
      %p216 = pneg %p215
      // Predicated region
      $region33: #{tpu_custom_call.1} parent=5 // pred_check
        _
      $region34: #{tpu_custom_call.1} parent=5 // pred_check_branch
        %218 = sbr.rel (%p215) target = $region36
      $region35: #{tpu_custom_call.1} parent=5 // pred_region
        %s219 = ssub.s32 %s18, 1
        %s220 = sand.u32 %s31, 1
        %s221 = scalar_lea.sflag [#allocation3], %s220
        %s222 = sand.u32 %s31, 1
        %s223 = smul.addr %s222, 64
        %s224 = scalar_lea.vmem [#allocation2], %s223
        // Predicated region
        $region37: #{tpu_custom_call.1} parent=35 // pred_check
          %p225 = pneg %p44
        $region38: #{tpu_custom_call.1} parent=35 // pred_check_branch
          %227 = sbr.rel (%p225) target = $region40
        $region39: #{tpu_custom_call.1} parent=35 // pred_region
          %228 = dma.done %s221, 1024
        $region40: #{tpu_custom_call.1} parent=35 // pred_fallthru
          _
        // Predicated region
        $region41: #{tpu_custom_call.1} parent=35 // pred_check
          %p229 = pneg %p65
        $region42: #{tpu_custom_call.1} parent=35 // pred_check_branch
          %231 = sbr.rel (%p229) target = $region44
        $region43: #{tpu_custom_call.1} parent=35 // pred_region
          %232 = dma.done [#allocation6], 256
        $region44: #{tpu_custom_call.1} parent=35 // pred_fallthru
          _
        // Predicated region
        $region45: #{tpu_custom_call.1} parent=35 // pred_check
          %p233 = pneg %p86
        $region46: #{tpu_custom_call.1} parent=35 // pred_check_branch
          %235 = sbr.rel (%p233) target = $region48
        $region47: #{tpu_custom_call.1} parent=35 // pred_region
          %236 = dma.done [#allocation6], 256
        $region48: #{tpu_custom_call.1} parent=35 // pred_fallthru
          _
        // Predicated region
        $region49: #{tpu_custom_call.1} parent=35 // pred_check
          %p237 = pneg %p107
        $region50: #{tpu_custom_call.1} parent=35 // pred_check_branch
          %239 = sbr.rel (%p237) target = $region52
        $region51: #{tpu_custom_call.1} parent=35 // pred_region
          %240 = dma.done [#allocation9], 256
        $region52: #{tpu_custom_call.1} parent=35 // pred_fallthru
          _
        %s241 = sand.u32 %s31, 1
        %s242 = scalar_lea.sflag [#allocation3], %s241
        %s243 = sand.u32 %s31, 1
        %s244 = smul.addr %s243, 64
        %s245 = scalar_lea.vmem [#allocation2], %s244
        %p246 = pneg %p44
        %p247 = pneg %p41
        %p248 = pneg %p65
        %p249 = pneg %p62
        %p250 = pneg %p86
        %p251 = pneg %p83
        %p252 = pneg %p107
        %p253 = pneg %p104
        %p254 = pneg %p133
        %p255 = pneg %p130
        %s256 = sand.u32 %s120, 1
        %s257 = scalar_lea.sflag [#allocation4], %s256
        %s258 = sand.u32 %s120, 1
        %s259 = smul.addr %s258, 64
        %s260 = scalar_lea.vmem [#allocation10], %s259
        %s261 = smul.u32 4, %s23
        %s262 = smul.u32 4, %s23
        %v263 = vld [vmem:[%s224] sm:$0xff]
        %v264 = vld [vmem:[%s224 + $0x8] sm:$0xff]
        %265 = vrot.lane.b32.xlu0 %v263, 127
        %v266 = vpop.permute.xlu0 %265
        %267 = vrot.lane.b32.xlu0 %v264, 127
        %v268 = vpop.permute.xlu0 %267
        %269 = vrot.lane.b32.xlu0 %v263, 1
        %v270 = vpop.permute.xlu0 %269
        %271 = vrot.lane.b32.xlu0 %v264, 1
        %v272 = vpop.permute.xlu0 %271
        %v273 = vld [vmem:[#allocation5] sm:$0xff]
        %v274 = vld [vmem:[#allocation5 + $0x8] sm:$0xff]
        %v275 = vmul.f32 %v263, %v273
        %v276 = vmul.f32 %v264, %v274
        %v277 = vld [vmem:[#allocation7] sm:$0xff]
        %v278 = vld [vmem:[#allocation7 + $0x8] sm:$0xff]
        %v279 = vmul.f32 %v266, %v277
        %v280 = vmul.f32 %v268, %v278
        %v281 = vadd.f32 %v275, %v279
        %v282 = vadd.f32 %v276, %v280
        %v283 = vld [vmem:[#allocation8] sm:$0xff]
        %v284 = vld [vmem:[#allocation8 + $0x8] sm:$0xff]
        %v285 = vmul.f32 %v270, %v283
        %v286 = vmul.f32 %v272, %v284
        %v287 = vadd.f32 %v281, %v285
        %v288 = vadd.f32 %v282, %v286
        %289 = vst [vmem:[%s260] sm:$0xff] %v287
        %290 = vst [vmem:[%s260 + $0x8] sm:$0xff] %v288
        %s291 = scalar_lea.vmem %s224, 16 [#allocation2]
        %v292 = vld [vmem:[%s291] sm:$0xff]
        %v293 = vld [vmem:[%s291 + $0x8] sm:$0xff]
        %294 = vrot.lane.b32.xlu0 %v292, 127
        %v295 = vpop.permute.xlu0 %294
        %296 = vrot.lane.b32.xlu0 %v293, 127
        %v297 = vpop.permute.xlu0 %296
        %298 = vrot.lane.b32.xlu0 %v292, 1
        %v299 = vpop.permute.xlu0 %298
        %300 = vrot.lane.b32.xlu0 %v293, 1
        %v301 = vpop.permute.xlu0 %300
        %v302 = vld [vmem:[#allocation5] sm:$0xff]
        %v303 = vld [vmem:[#allocation5 + $0x8] sm:$0xff]
        %v304 = vmul.f32 %v292, %v302
        %v305 = vmul.f32 %v293, %v303
        %v306 = vld [vmem:[#allocation7] sm:$0xff]
        %v307 = vld [vmem:[#allocation7 + $0x8] sm:$0xff]
        %v308 = vmul.f32 %v295, %v306
        %v309 = vmul.f32 %v297, %v307
        %v310 = vadd.f32 %v304, %v308
        %v311 = vadd.f32 %v305, %v309
        %v312 = vld [vmem:[#allocation8] sm:$0xff]
        %v313 = vld [vmem:[#allocation8 + $0x8] sm:$0xff]
        %v314 = vmul.f32 %v299, %v312
        %v315 = vmul.f32 %v301, %v313
        %v316 = vadd.f32 %v310, %v314
        %v317 = vadd.f32 %v311, %v315
        %s318 = scalar_lea.vmem %s260, 16 [#allocation10]
        %319 = vst [vmem:[%s318] sm:$0xff] %v316
        %320 = vst [vmem:[%s318 + $0x8] sm:$0xff] %v317
        %s321 = scalar_lea.vmem %s224, 32 [#allocation2]
        %v322 = vld [vmem:[%s321] sm:$0xff]
        %v323 = vld [vmem:[%s321 + $0x8] sm:$0xff]
        %324 = vrot.lane.b32.xlu0 %v322, 127
        %v325 = vpop.permute.xlu0 %324
        %326 = vrot.lane.b32.xlu0 %v323, 127
        %v327 = vpop.permute.xlu0 %326
        %328 = vrot.lane.b32.xlu0 %v322, 1
        %v329 = vpop.permute.xlu0 %328
        %330 = vrot.lane.b32.xlu0 %v323, 1
        %v331 = vpop.permute.xlu0 %330
        %v332 = vld [vmem:[#allocation5] sm:$0xff]
        %v333 = vld [vmem:[#allocation5 + $0x8] sm:$0xff]
        %v334 = vmul.f32 %v322, %v332
        %v335 = vmul.f32 %v323, %v333
        %v336 = vld [vmem:[#allocation7] sm:$0xff]
        %v337 = vld [vmem:[#allocation7 + $0x8] sm:$0xff]
        %v338 = vmul.f32 %v325, %v336
        %v339 = vmul.f32 %v327, %v337
        %v340 = vadd.f32 %v334, %v338
        %v341 = vadd.f32 %v335, %v339
        %v342 = vld [vmem:[#allocation8] sm:$0xff]
        %v343 = vld [vmem:[#allocation8 + $0x8] sm:$0xff]
        %v344 = vmul.f32 %v329, %v342
        %v345 = vmul.f32 %v331, %v343
        %v346 = vadd.f32 %v340, %v344
        %v347 = vadd.f32 %v341, %v345
        %s348 = scalar_lea.vmem %s260, 32 [#allocation10]
        %349 = vst [vmem:[%s348] sm:$0xff] %v346
        %350 = vst [vmem:[%s348 + $0x8] sm:$0xff] %v347
        %s351 = scalar_lea.vmem %s224, 48 [#allocation2]
        %v352 = vld [vmem:[%s351] sm:$0xff]
        %v353 = vld [vmem:[%s351 + $0x8] sm:$0xff]
        %354 = vrot.lane.b32.xlu0 %v352, 127
        %v355 = vpop.permute.xlu0 %354
        %356 = vrot.lane.b32.xlu0 %v353, 127
        %v357 = vpop.permute.xlu0 %356
        %358 = vrot.lane.b32.xlu0 %v352, 1
        %v359 = vpop.permute.xlu0 %358
        %360 = vrot.lane.b32.xlu0 %v353, 1
        %v361 = vpop.permute.xlu0 %360
        %v362 = vld [vmem:[#allocation5] sm:$0xff]
        %v363 = vld [vmem:[#allocation5 + $0x8] sm:$0xff]
        %v364 = vmul.f32 %v352, %v362
        %v365 = vmul.f32 %v353, %v363
        %v366 = vld [vmem:[#allocation7] sm:$0xff]
        %v367 = vld [vmem:[#allocation7 + $0x8] sm:$0xff]
        %v368 = vmul.f32 %v355, %v366
        %v369 = vmul.f32 %v357, %v367
        %v370 = vadd.f32 %v364, %v368
        %v371 = vadd.f32 %v365, %v369
        %v372 = vld [vmem:[#allocation8] sm:$0xff]
        %v373 = vld [vmem:[#allocation8 + $0x8] sm:$0xff]
        %v374 = vmul.f32 %v359, %v372
        %v375 = vmul.f32 %v361, %v373
        %v376 = vadd.f32 %v370, %v374
        %v377 = vadd.f32 %v371, %v375
        %s378 = scalar_lea.vmem %s260, 48 [#allocation10]
        %379 = vst [vmem:[%s378] sm:$0xff] %v376
        %380 = vst [vmem:[%s378 + $0x8] sm:$0xff] %v377
        %s381 = sand.u32 %s120, 1
        %s382 = scalar_lea.sflag [#allocation4], %s381
        %s383 = sand.u32 %s120, 1
        %s384 = smul.addr %s383, 64
        %s385 = scalar_lea.vmem [#allocation10], %s384
        // Predicated region
        $region53: #{tpu_custom_call.1} parent=35 // pred_check
          %p386 = pneg %p130
        $region54: #{tpu_custom_call.1} parent=35 // pred_check_branch
          %388 = sbr.rel (%p386) target = $region56
        $region55: #{tpu_custom_call.1} parent=35 // pred_region
          %s389 = smul.u32 4, %s23
          %s391 = ssub.s32 1024, 1024
          %392 = vsyncadd %s382, %s391
          %s393 = smul.addr %s389, 2
          %s394 = smul.addr %s393, 128
          %s395 = scalar_lea.hbm %s4, %s394
          %s396 = sshll.u32 %s385, 4
          %s397 = int_to_ptr.vmem [resolvable:$true] %s396
          %402 = dma.vmem_to_hbm [thread:$0]  %s397, 1024, %s395, %s382, 128, 128, 8
        $region56: #{tpu_custom_call.1} parent=35 // pred_fallthru
          _
      $region36: #{tpu_custom_call.1} parent=5 // pred_fallthru
        _
      %p403 = scmp.le.s32.totalorder 2, %s18
      // Predicated region
      $region57: #{tpu_custom_call.1} parent=5 // pred_check
        %p404 = pneg %p403
      $region58: #{tpu_custom_call.1} parent=5 // pred_check_branch
        %406 = sbr.rel (%p404) target = $region60
      $region59: #{tpu_custom_call.1} parent=5 // pred_region
        %s407 = ssub.s32 %s18, 2
        // Predicated region
        $region61: #{tpu_custom_call.1} parent=59 // pred_check
          %p408 = pneg %p136
        $region62: #{tpu_custom_call.1} parent=59 // pred_check_branch
          %410 = sbr.rel (%p408) target = $region64
        $region63: #{tpu_custom_call.1} parent=59 // pred_region
          %s411 = sand.u32 %s121, 1
          %s412 = scalar_lea.sflag [#allocation4], %s411
          %s413 = sand.u32 %s121, 1
          %s414 = smul.addr %s413, 64
          %s415 = scalar_lea.vmem [#allocation10], %s414
          %416 = dma.done %s412, 1024
        $region64: #{tpu_custom_call.1} parent=59 // pred_fallthru
          _
      $region60: #{tpu_custom_call.1} parent=5 // pred_fallthru
        _
    $region6: #{tpu_custom_call.1} parent=1 // loop_footer
      %s22 = sadd.s32 1, %s18
    $region7: #{tpu_custom_call.1} parent=1 // loop_footer_branch
      %17 = sbr.rel target = $region3
    $region8: #{tpu_custom_call.1} parent=1 // loop_exit
      _
    %417 = vsyncpa [#allocation3], 1
    %s418 = scalar_lea.sflag [#allocation3], 1
    %419 = vsyncpa %s418, 1
    %420 = vsyncpa [#allocation6], 1
    %421 = vsyncpa [#allocation9], 1
    %422 = vsyncpa [#allocation4], 1
    %s423 = scalar_lea.sflag [#allocation4], 1
    %424 = vsyncpa %s423, 1

</llo_original>
